<compile_context>
chip_gen: v7x
topology: tpu7x:2x2x1
jax: 0.10.0
libtpu: 0.0.40
codegen_flags: <defaults>
</compile_context>

<pallas_src>
import jax
import jax.numpy as jnp
from jax.experimental import pallas as pl
from jax.experimental.pallas import tpu as pltpu

EPS = 1e-5
LANE = 128
TILE_M = 1024          # adjacency row tile (output rows per grid step)
TILE_K_DEFAULT = 1024  # reduction tile (v5e/v6e)
TILE_K_V7X = 2048      # v7x: ~3.2 TB/s HBM makes per-step overhead 2x as costly


def round_up(x, m):
    return ((x + m - 1) // m) * m


def _tile_k_max():
    # v7x is identifiable by its 64 MiB per-TensorCore VMEM (v5e/v6e: 128 MiB).
    try:
        info = pltpu.get_tpu_info()
        vmem = getattr(info, "vmem_capacity_bytes", 0)
        if vmem and vmem <= 64 * 1024 * 1024:
            return TILE_K_V7X
    except Exception:
        pass
    return TILE_K_DEFAULT


# ---------------------------------------------------------------------------
# Stage 1 (single block): Hs = D^-1/2 * (BN1(x) @ W_gcn + b_pre)
#   BN1 is folded into W_gcn/b_pre; the right half of the symmetric GCN
#   normalization is folded into H so the N^2 adjacency stays raw counts.
# ---------------------------------------------------------------------------
def feat_kernel(x_ref, w_ref, b_ref, dinv_ref, h_ref):
    h = jnp.dot(x_ref[...], w_ref[...], preferred_element_type=jnp.float32)
    h = (h + b_ref[...]) * dinv_ref[...]
    h_ref[...] = h.astype(h_ref.dtype)          # bf16 for the stage-2 MXU / HBM stream


# ---------------------------------------------------------------------------
# Stage 2: tiled (A + I) @ Hs, then per-row D^-1/2 scale + b_gcn + ELU and
#          per-row-tile pooled partials.  grid = (row_tiles[par], k_tiles[arb])
# ---------------------------------------------------------------------------
def agg_kernel(adj_ref, h_ref, pool_ref, dinvr_ref, bpost_ref, part_ref, acc_ref):
    k = pl.program_id(1)

    @pl.when(k == 0)
    def _():
        acc_ref[...] = jnp.zeros_like(acc_ref)

    # bf16 (raw adjacency counts) x bf16 (pre-scaled H) on the MXU, f32 accumulation.
    acc_ref[...] += jnp.dot(adj_ref[...], h_ref[...],
                            preferred_element_type=jnp.float32)

    @pl.when(k == pl.num_programs(1) - 1)
    def _():
        # Left half of the symmetric normalization + GCNConv bias (post-aggregation).
        y = acc_ref[...] * dinvr_ref[...] + bpost_ref[...]
        y = jnp.where(y > 0, y, jnp.exp(jnp.minimum(y, 0.0)) - 1.0)   # ELU(alpha=1)
        # NOTE: padded rows give y = ELU(b_gcn) != 0 here; they are zeroed only
        # because the corresponding pool columns are 0 — keep the pooling matrix
        # zero-padded if this path is ever changed.
        part_ref[...] = jnp.dot(pool_ref[...], y.astype(jnp.bfloat16),
                                preferred_element_type=jnp.float32)[None, :, :]


# ---------------------------------------------------------------------------
# Stage 3: reduce pooled partials over row tiles + Linear(20, 2) (BN2 folded)
# ---------------------------------------------------------------------------
def tail_kernel(part_ref, w_ref, b_ref, out_ref):
    pooled = jnp.sum(part_ref[...], axis=0)                     # [G, hidden]
    out_ref[...] = jnp.dot(pooled, w_ref[...],
                           preferred_element_type=jnp.float32) + b_ref[...]


def fold_params(params):
    """Fold eval-mode BatchNorms into the adjacent linear maps."""
    s1 = params["bn1_g"] * jax.lax.rsqrt(params["bn1_v"] + EPS)      # [1, dim]
    t1 = params["bn1_b"] - params["bn1_m"] * s1                      # [1, dim]
    w_gcn_f = params["w_gcn"] * s1.reshape(-1, 1)                    # [dim, hidden]
    b_pre = t1 @ params["w_gcn"]                                     # [1, hidden] (pre-aggregation)
    b_post = params["b_gcn"]                                         # [1, hidden] (post-aggregation)

    s2 = params["bn2_g"] * jax.lax.rsqrt(params["bn2_v"] + EPS)      # [1, hidden]
    t2 = params["bn2_b"] - params["bn2_m"] * s2
    w_lin_f = params["w_lin"] * s2.reshape(-1, 1)                    # [hidden, out]
    b_lin_f = t2 @ params["w_lin"] + params["b_lin"]                 # [1, out]
    return w_gcn_f, b_pre, b_post, w_lin_f, b_lin_f


def gcn_forward(x, edge_index, batch, params, num_graphs):
    N, dim = x.shape
    hidden = params["w_gcn"].shape[1]        # 20
    out_dim = params["w_lin"].shape[1]       # 2

    # --- tiling (the only O(N^2) object is the adjacency, streamed in bf16) ---
    tk_max = _tile_k_max()
    n_pad = round_up(N, LANE)
    if n_pad > TILE_M:
        n_pad = round_up(n_pad, TILE_M)
    tm = min(TILE_M, n_pad)
    if tm == n_pad and n_pad >= 1024:
        tm = n_pad // 2                      # >= 2 row tiles so both v7x TCs get work
    if n_pad <= tk_max:
        tk = n_pad
    elif n_pad % tk_max == 0:
        tk = tk_max
    else:
        tk = TILE_M
    n_i = n_pad // tm
    n_k = n_pad // tk

    # --- glue (plain JAX): ONE bf16 N^2 write, everything else O(E)/O(N) ---
    src, dst = edge_index[0], edge_index[1]
    loops = jnp.arange(N, dtype=edge_index.dtype)
    src2 = jnp.concatenate([src, loops])
    dst2 = jnp.concatenate([dst, loops])
    # Unnormalized (A + I), PyG orientation A[target, source]; duplicate edges
    # accumulate (small integer counts are exact in bf16).
    adj_p = jnp.zeros((n_pad, n_pad), jnp.bfloat16).at[dst2, src2].add(1.0)

    # Degrees at the target index (O(E)), +1 for the self loop.
    deg = jnp.zeros((N,), jnp.float32).at[dst].add(1.0) + 1.0
    dinv = jnp.where(deg > 0, jax.lax.rsqrt(deg), 0.0)
    dinv_p = jnp.zeros((n_pad, 1), jnp.float32).at[:N, 0].set(dinv)

    # Mean-pool matrix P[g, n] = 1/|graph g|, built directly at padded width
    # (padded columns stay 0 => padded rows cannot leak into the pooled sum).
    batch_p = jnp.full((n_pad,), -1, jnp.int32).at[:N].set(batch.astype(jnp.int32))
    onehot = (batch_p[None, :] ==
              jnp.arange(num_graphs, dtype=jnp.int32)[:, None]).astype(jnp.float32)
    counts = jnp.maximum(jnp.sum(onehot, axis=1, keepdims=True), 1.0)
    pool_p = (onehot / counts).astype(jnp.bfloat16)

    x_p = jnp.zeros((n_pad, dim), jnp.float32).at[:N].set(x)

    w_gcn_f, b_pre, b_post, w_lin_f, b_lin_f = fold_params(params)

    # --- stage 1: node feature transform, single block (<0.1% of the work) ---
    hs = pl.pallas_call(
        feat_kernel,
        out_shape=jax.ShapeDtypeStruct((n_pad, hidden), jnp.bfloat16),
        grid=(1,),
        in_specs=[pl.BlockSpec((n_pad, dim), lambda i: (0, 0)),
                  pl.BlockSpec((dim, hidden), lambda i: (0, 0)),
                  pl.BlockSpec((1, hidden), lambda i: (0, 0)),
                  pl.BlockSpec((n_pad, 1), lambda i: (0, 0))],
        out_specs=pl.BlockSpec((n_pad, hidden), lambda i: (0, 0)),
        compiler_params=pltpu.CompilerParams(
            dimension_semantics=("arbitrary",),
            vmem_limit_bytes=32 * 1024 * 1024),
    )(x_p, w_gcn_f, b_pre, dinv_p)

    # --- stage 2: pipelined (A+I) @ Hs + D^-1/2 scale + ELU + pooled partials ---
    partials = pl.pallas_call(
        agg_kernel,
        out_shape=jax.ShapeDtypeStruct((n_i, num_graphs, hidden), jnp.float32),
        grid=(n_i, n_k),
        in_specs=[pl.BlockSpec((tm, tk), lambda i, k: (i, k)),
                  pl.BlockSpec((tk, hidden), lambda i, k: (k, 0)),
                  pl.BlockSpec((num_graphs, tm), lambda i, k: (0, i)),
                  pl.BlockSpec((tm, 1), lambda i, k: (i, 0)),
                  pl.BlockSpec((1, hidden), lambda i, k: (0, 0))],
        out_specs=pl.BlockSpec((1, num_graphs, hidden), lambda i, k: (i, 0, 0)),
        scratch_shapes=[pltpu.VMEM((tm, hidden), jnp.float32)],
        compiler_params=pltpu.CompilerParams(
            dimension_semantics=("parallel", "arbitrary"),
            vmem_limit_bytes=32 * 1024 * 1024),
    )(adj_p, hs, pool_p, dinv_p, b_post)

    # --- stage 3: reduce partials + BN2-folded Linear(hidden, 2) ---
    out = pl.pallas_call(
        tail_kernel,
        out_shape=jax.ShapeDtypeStruct((num_graphs, out_dim), jnp.float32),
        grid=(1,),
        in_specs=[pl.BlockSpec((n_i, num_graphs, hidden), lambda i: (0, 0, 0)),
                  pl.BlockSpec((hidden, out_dim), lambda i: (0, 0)),
                  pl.BlockSpec((1, out_dim), lambda i: (0, 0))],
        out_specs=pl.BlockSpec((num_graphs, out_dim), lambda i: (0, 0)),
        compiler_params=pltpu.CompilerParams(
            dimension_semantics=("arbitrary",)),
    )(partials, w_lin_f, b_lin_f)

    return out


def init_params(dim, hidden=20, out_dim=2):
    key = jax.random.PRNGKey(0)
    k1, k2, k3, k4 = jax.random.split(key, 4)
    return {
        # BatchNorm(dim): PyTorch init (gamma=1, beta=0, running_mean=0, running_var=1)
        "bn1_g": jnp.ones((1, dim), jnp.float32),
        "bn1_b": jnp.zeros((1, dim), jnp.float32),
        "bn1_m": jnp.zeros((1, dim), jnp.float32),
        "bn1_v": jnp.ones((1, dim), jnp.float32),
        # GCNConv(dim, hidden): weight [dim, hidden] (already transposed), bias [1, hidden]
        "w_gcn": jax.random.normal(k1, (dim, hidden), jnp.float32) * 0.1,
        "b_gcn": jax.random.normal(k2, (1, hidden), jnp.float32) * 0.01,
        # BatchNorm(hidden)
        "bn2_g": jnp.ones((1, hidden), jnp.float32),
        "bn2_b": jnp.zeros((1, hidden), jnp.float32),
        "bn2_m": jnp.zeros((1, hidden), jnp.float32),
        "bn2_v": jnp.ones((1, hidden), jnp.float32),
        # Linear(hidden, out_dim): weight stored transposed [hidden, out_dim], bias [1, out_dim]
        "w_lin": jax.random.normal(k3, (hidden, out_dim), jnp.float32) * 0.1,
        "b_lin": jax.random.normal(k4, (1, out_dim), jnp.float32) * 0.01,
    }


if __name__ == "__main__":
    # Small synthetic graph batch: 16 nodes, 8 features (dim <= 16 branch), 2 graphs.
    N, dim, num_graphs = 16, 8, 2
    key = jax.random.PRNGKey(0)
    kx, ke = jax.random.split(key)

    x = jax.random.normal(kx, (N, dim), jnp.float32)

    # 32 random directed edges within node range (self-loops added in glue anyway).
    src = jax.random.randint(ke, (32,), 0, N)
    dst = jnp.roll(src, 1)
    edge_index = jnp.stack([src, dst], axis=0).astype(jnp.int32)   # [2, 32]

    # Nodes 0..7 -> graph 0, nodes 8..15 -> graph 1.
    batch = jnp.concatenate([jnp.zeros(8, jnp.int32), jnp.ones(8, jnp.int32)])

    params = init_params(dim)
    out = gcn_forward(x, edge_index, batch, params, num_graphs)
    out = jax.block_until_ready(out)
    assert out.shape == (num_graphs, 2) and out.dtype == jnp.float32
    print("KERNEL_OK")
</pallas_src>

<mosaic_0001>
module attributes {stable_mosaic.version = 11 : i64} {
  func.func @feat_kernel(%arg0: i32, %arg1: memref<128x8xf32, #tpu.memory_space<vmem>>, %arg2: memref<8x20xf32, #tpu.memory_space<vmem>>, %arg3: memref<1x20xf32, #tpu.memory_space<vmem>>, %arg4: memref<128x1xf32, #tpu.memory_space<vmem>>, %arg5: memref<128x20xbf16, #tpu.memory_space<vmem>>) attributes {dimension_semantics = [#tpu.dimension_semantics<arbitrary>], iteration_bounds = array<i64: 1>, scalar_prefetch = 0 : i64, scratch_operands = 0 : i64, tpu.core_type = #tpu.core_type<tc>, window_params = [{pipeline_mode = #tpu.pipeline_mode<synchronous>, transform_indices = @transform_0, window_bounds = array<i64: 128, 8>}, {pipeline_mode = #tpu.pipeline_mode<synchronous>, transform_indices = @transform_1, window_bounds = array<i64: 8, 20>}, {pipeline_mode = #tpu.pipeline_mode<synchronous>, transform_indices = @transform_2, window_bounds = array<i64: 1, 20>}, {pipeline_mode = #tpu.pipeline_mode<synchronous>, transform_indices = @transform_3, window_bounds = array<i64: 128, 1>}, {pipeline_mode = #tpu.pipeline_mode<synchronous>, transform_indices = @transform_4, window_bounds = array<i64: 128, 20>}]} {
    %c0 = arith.constant 0 : index
    %c0_0 = arith.constant 0 : index
    %0 = vector.load %arg1[%c0, %c0_0] : memref<128x8xf32, #tpu.memory_space<vmem>>, vector<128x8xf32>
    %c0_1 = arith.constant 0 : index
    %c0_2 = arith.constant 0 : index
    %1 = vector.load %arg2[%c0_1, %c0_2] : memref<8x20xf32, #tpu.memory_space<vmem>>, vector<8x20xf32>
    %cst = arith.constant dense<0.000000e+00> : vector<128x20xf32>
    %2 = tpu.matmul %0, %1, %cst {dimension_numbers = #tpu.dot_dimension_numbers<[1], [0], [0], [1], [0, 0, 1, 1], [], []>} : vector<128x8xf32>, vector<8x20xf32>, vector<128x20xf32> -> vector<128x20xf32>
    %c0_3 = arith.constant 0 : index
    %c0_4 = arith.constant 0 : index
    %3 = vector.load %arg3[%c0_3, %c0_4] : memref<1x20xf32, #tpu.memory_space<vmem>>, vector<1x20xf32>
    %4 = vector.broadcast %3 : vector<1x20xf32> to vector<128x20xf32>
    %5 = arith.addf %2, %4 : vector<128x20xf32>
    %c0_5 = arith.constant 0 : index
    %c0_6 = arith.constant 0 : index
    %6 = vector.load %arg4[%c0_5, %c0_6] : memref<128x1xf32, #tpu.memory_space<vmem>>, vector<128x1xf32>
    %7 = vector.broadcast %6 : vector<128x1xf32> to vector<128x20xf32>
    %8 = arith.mulf %5, %7 : vector<128x20xf32>
    %9 = arith.truncf %8 : vector<128x20xf32> to vector<128x20xbf16>
    %c0_7 = arith.constant 0 : index
    %c0_8 = arith.constant 0 : index
    %10 = vector.load %arg5[%c0_7, %c0_8] : memref<128x20xbf16, #tpu.memory_space<vmem>>, vector<128x20xbf16>
    tpu.vector_store %arg5[%c0_7, %c0_8], %9 {strides = array<i32>} : memref<128x20xbf16, #tpu.memory_space<vmem>>, vector<128x20xbf16>,
    return
  }
  func.func @transform_0(%arg0: i32) -> (i32, i32) {
    %c0_i32 = arith.constant 0 : i32
    %c0_i32_0 = arith.constant 0 : i32
    %c0_i32_1 = arith.constant 0 : i32
    return %c0_i32, %c0_i32_0 : i32, i32
  }
  func.func @transform_1(%arg0: i32) -> (i32, i32) {
    %c0_i32 = arith.constant 0 : i32
    %c0_i32_0 = arith.constant 0 : i32
    %c0_i32_1 = arith.constant 0 : i32
    return %c0_i32, %c0_i32_0 : i32, i32
  }
  func.func @transform_2(%arg0: i32) -> (i32, i32) {
    %c0_i32 = arith.constant 0 : i32
    %c0_i32_0 = arith.constant 0 : i32
    %c0_i32_1 = arith.constant 0 : i32
    return %c0_i32, %c0_i32_0 : i32, i32
  }
  func.func @transform_3(%arg0: i32) -> (i32, i32) {
    %c0_i32 = arith.constant 0 : i32
    %c0_i32_0 = arith.constant 0 : i32
    %c0_i32_1 = arith.constant 0 : i32
    return %c0_i32, %c0_i32_0 : i32, i32
  }
  func.func @transform_4(%arg0: i32) -> (i32, i32) {
    %c0_i32 = arith.constant 0 : i32
    %c0_i32_0 = arith.constant 0 : i32
    %c0_i32_1 = arith.constant 0 : i32
    return %c0_i32, %c0_i32_0 : i32, i32
  }
}

</mosaic_0001>

<llo_original>
// kernel: tpu_custom_call.1
$region0: #{tpu_custom_call.1}
  #allocation0 [shape = 'u32[]', space=smem, size = 0x4, offset = 0x4, fixed_abs, tag = 'smem constant byte address 0x4 - core index']
  #allocation1 [shape = 'u32[144,128]{1,0:T(1,128)}', space=vmem, size = 0x12000, scoped, tag = 'internal scratch']
  %s0 = inlined_call_operand.vmem [shape: f32[128,8], index: 0, kind: input, shape index: {}]
  %s1 = inlined_call_operand.vmem [shape: f32[8,20], index: 1, kind: input, shape index: {}]
  %s2 = inlined_call_operand.vmem [shape: f32[1,20], index: 2, kind: input, shape index: {}]
  %s3 = inlined_call_operand.vmem [shape: f32[128,1], index: 3, kind: input, shape index: {}]
  %s4 = inlined_call_operand.vmem [shape: bf16[128,20], index: 4, kind: output, shape index: {}]
  %s5 = sld [smem:[#allocation0]]
  $region26: #{tpu_custom_call.1} parent=0
    _
  %s7 = ssub.s32 1, %s5
  %s8 = scalar_select 0, %s7, %s5
  // Predicated region
  $region2: #{tpu_custom_call.1} parent=0 // pred_check
    _
  $region3: #{tpu_custom_call.1} parent=0 // pred_check_branch
    %10 = sbr.rel (0) target = $region5
  $region4: #{tpu_custom_call.1} parent=0 // pred_region
    _
  $region5: #{tpu_custom_call.1} parent=0 // pred_fallthru
    _
  // Predicated region
  $region6: #{tpu_custom_call.1} parent=0 // pred_check
    _
  $region7: #{tpu_custom_call.1} parent=0 // pred_check_branch
    %12 = sbr.rel (0) target = $region9
  $region8: #{tpu_custom_call.1} parent=0 // pred_region
    _
  $region9: #{tpu_custom_call.1} parent=0 // pred_fallthru
    _
  // Predicated region
  $region10: #{tpu_custom_call.1} parent=0 // pred_check
    _
  $region11: #{tpu_custom_call.1} parent=0 // pred_check_branch
    %14 = sbr.rel (0) target = $region13
  $region12: #{tpu_custom_call.1} parent=0 // pred_region
    _
  $region13: #{tpu_custom_call.1} parent=0 // pred_fallthru
    _
  // Predicated region
  $region14: #{tpu_custom_call.1} parent=0 // pred_check
    _
  $region15: #{tpu_custom_call.1} parent=0 // pred_check_branch
    %16 = sbr.rel (0) target = $region17
  $region16: #{tpu_custom_call.1} parent=0 // pred_region
    _
  $region17: #{tpu_custom_call.1} parent=0 // pred_fallthru
    _
  %v17 = vld [vmem:[%s0] sm:$0xff]
  %v18 = vld [vmem:[%s0 + $0x8] sm:$0xff]
  %v19 = vld [vmem:[%s0 + $0x10] sm:$0xff]
  %v20 = vld [vmem:[%s0 + $0x18] sm:$0xff]
  %v21 = vld [vmem:[%s0 + $0x20] sm:$0xff]
  %v22 = vld [vmem:[%s0 + $0x28] sm:$0xff]
  %v23 = vld [vmem:[%s0 + $0x30] sm:$0xff]
  %v24 = vld [vmem:[%s0 + $0x38] sm:$0xff]
  %v25 = vld [vmem:[%s0 + $0x40] sm:$0xff]
  %v26 = vld [vmem:[%s0 + $0x48] sm:$0xff]
  %v27 = vld [vmem:[%s0 + $0x50] sm:$0xff]
  %v28 = vld [vmem:[%s0 + $0x58] sm:$0xff]
  %v29 = vld [vmem:[%s0 + $0x60] sm:$0xff]
  %v30 = vld [vmem:[%s0 + $0x68] sm:$0xff]
  %v31 = vld [vmem:[%s0 + $0x70] sm:$0xff]
  %v32 = vld [vmem:[%s0 + $0x78] sm:$0xff]
  %v33 = vld [vmem:[%s1] sm:$0xff]
  %v34 = vld [vmem:[%s2] sm:$0x1]
  %v36 = vlaneseq
  %v37 = vshrl.u32 %v36, 7
  %v38 = vsub.s32 0, %v37
  %v39 = vrot.slane %v34, %v38
  %vm41 = vcmask 64512
  %v43 = vsel %vm41, %v17, 0
  %v46 = vsel %vm41, %v18, 0
  %v49 = vsel %vm41, %v19, 0
  %v52 = vsel %vm41, %v20, 0
  %v55 = vsel %vm41, %v21, 0
  %v58 = vsel %vm41, %v22, 0
  %v61 = vsel %vm41, %v23, 0
  %v64 = vsel %vm41, %v24, 0
  %v67 = vsel %vm41, %v25, 0
  %v70 = vsel %vm41, %v26, 0
  %v73 = vsel %vm41, %v27, 0
  %v76 = vsel %vm41, %v28, 0
  %v79 = vsel %vm41, %v29, 0
  %v82 = vsel %vm41, %v30, 0
  %v85 = vsel %vm41, %v31, 0
  %v88 = vsel %vm41, %v32, 0
  %90 = vmatprep.subr.mxu0 0.0
  %91 = vmatpush1.msra.mxu0 %v33
  %92 = vmatprep.subr.mxu0 0.0
  %93 = vmatpush1.msra.mxu0 0.0
  %94 = vmatprep.subr.mxu0 0.0
  %95 = vmatpush1.msra.mxu0 0.0
  %96 = vmatprep.subr.mxu0 0.0
  %97 = vmatpush1.msra.mxu0 0.0
  %98 = vmatprep.subr.mxu0 0.0
  %99 = vmatpush1.msra.mxu0 0.0
  %100 = vmatprep.subr.mxu0 0.0
  %101 = vmatpush1.msra.mxu0 0.0
  %102 = vmatprep.subr.mxu0 0.0
  %103 = vmatpush1.msra.mxu0 0.0
  %104 = vmatprep.subr.mxu0 0.0
  %105 = vmatpush1.msra.mxu0 0.0
  %106 = vmatprep.subr.mxu0 0.0
  %107 = vmatpush1.msra.mxu0 0.0
  %108 = vmatprep.subr.mxu0 0.0
  %109 = vmatpush1.msra.mxu0 0.0
  %110 = vmatprep.subr.mxu0 0.0
  %111 = vmatpush1.msra.mxu0 0.0
  %112 = vmatprep.subr.mxu0 0.0
  %113 = vmatpush1.msra.mxu0 0.0
  %114 = vmatprep.subr.mxu0 0.0
  %115 = vmatpush1.msra.mxu0 0.0
  %116 = vmatprep.subr.mxu0 0.0
  %117 = vmatpush1.msra.mxu0 0.0
  %118 = vmatprep.subr.mxu0 0.0
  %119 = vmatpush1.msra.mxu0 0.0
  %120 = vmatprep.subr.mxu0 0.0
  %121 = vmatpush1.msra.mxu0 0.0
  %122 = vmatprep.subr.mxu0 0.0
  %123 = vmatpush1.msra.mxu0 0.0
  %124 = vmatprep.subr.mxu0 0.0
  %125 = vmatpush1.msra.mxu0 0.0
  %126 = vmatprep.subr.mxu0 0.0
  %127 = vmatpush1.msra.mxu0 0.0
  %128 = vmatprep.subr.mxu0 0.0
  %129 = vmatpush1.msra.mxu0 0.0
  %130 = vmatprep.subr.mxu0 0.0
  %131 = vmatpush1.msra.mxu0 0.0
  %132 = vmatprep.subr.mxu0 0.0
  %133 = vmatpush1.msra.mxu0 0.0
  %134 = vmatprep.subr.mxu0 0.0
  %135 = vmatpush1.msra.mxu0 0.0
  %136 = vmatprep.subr.mxu0 0.0
  %137 = vmatpush1.msra.mxu0 0.0
  %138 = vmatprep.subr.mxu0 0.0
  %139 = vmatpush1.msra.mxu0 0.0
  %140 = vmatprep.subr.mxu0 0.0
  %141 = vmatpush1.msra.mxu0 0.0
  %142 = vmatprep.subr.mxu0 0.0
  %143 = vmatpush1.msra.mxu0 0.0
  %144 = vmatprep.subr.mxu0 0.0
  %145 = vmatpush1.msra.mxu0 0.0
  %146 = vmatprep.subr.mxu0 0.0
  %147 = vmatpush1.msra.mxu0 0.0
  %148 = vmatprep.subr.mxu0 0.0
  %149 = vmatpush1.msra.mxu0 0.0
  %150 = vmatprep.subr.mxu0 0.0
  %151 = vmatpush1.msra.mxu0 0.0
  %152 = vmatprep.subr.mxu0 0.0
  %153 = vmatpush1.msra.mxu0 0.0
  %154 = vmatprep.mubr.f32.mxu0 0.0
  %155 = vmatmul.mubr.f32.gmra.mrb[0].mxu0 %v43
  %v156 = vpop.f32.mrb[0].mxu0
  %v157 = vadd.f32 %v39, %v156
  %v158 = vpop.f32.mrb[0].mxu0
  %159 = vmatprep.mubr.f32.mxu0 0.0
  %160 = vmatmul.mubr.f32.gmra.mrb[0].mxu0 %v46
  %v161 = vpop.f32.mrb[0].mxu0
  %v162 = vadd.f32 %v39, %v161
  %v163 = vpop.f32.mrb[0].mxu0
  %164 = vmatprep.mubr.f32.mxu0 0.0
  %165 = vmatmul.mubr.f32.gmra.mrb[0].mxu0 %v49
  %v166 = vpop.f32.mrb[0].mxu0
  %v167 = vadd.f32 %v39, %v166
  %v168 = vpop.f32.mrb[0].mxu0
  %169 = vmatprep.mubr.f32.mxu0 0.0
  %170 = vmatmul.mubr.f32.gmra.mrb[0].mxu0 %v52
  %v171 = vpop.f32.mrb[0].mxu0
  %v172 = vadd.f32 %v39, %v171
  %v173 = vpop.f32.mrb[0].mxu0
  %174 = vmatprep.mubr.f32.mxu0 0.0
  %175 = vmatmul.mubr.f32.gmra.mrb[0].mxu0 %v55
  %v176 = vpop.f32.mrb[0].mxu0
  %v177 = vadd.f32 %v39, %v176
  %v178 = vpop.f32.mrb[0].mxu0
  %179 = vmatprep.mubr.f32.mxu0 0.0
  %180 = vmatmul.mubr.f32.gmra.mrb[0].mxu0 %v58
  %v181 = vpop.f32.mrb[0].mxu0
  %v182 = vadd.f32 %v39, %v181
  %v183 = vpop.f32.mrb[0].mxu0
  %184 = vmatprep.mubr.f32.mxu0 0.0
  %185 = vmatmul.mubr.f32.gmra.mrb[0].mxu0 %v61
  %v186 = vpop.f32.mrb[0].mxu0
  %v187 = vadd.f32 %v39, %v186
  %v188 = vpop.f32.mrb[0].mxu0
  %189 = vmatprep.mubr.f32.mxu0 0.0
  %190 = vmatmul.mubr.f32.gmra.mrb[0].mxu0 %v64
  %v191 = vpop.f32.mrb[0].mxu0
  %v192 = vadd.f32 %v39, %v191
  %v193 = vpop.f32.mrb[0].mxu0
  %194 = vmatprep.mubr.f32.mxu0 0.0
  %195 = vmatmul.mubr.f32.gmra.mrb[0].mxu0 %v67
  %v196 = vpop.f32.mrb[0].mxu0
  %v197 = vadd.f32 %v39, %v196
  %v198 = vpop.f32.mrb[0].mxu0
  %199 = vmatprep.mubr.f32.mxu0 0.0
  %200 = vmatmul.mubr.f32.gmra.mrb[0].mxu0 %v70
  %v201 = vpop.f32.mrb[0].mxu0
  %v202 = vadd.f32 %v39, %v201
  %v203 = vpop.f32.mrb[0].mxu0
  %204 = vmatprep.mubr.f32.mxu0 0.0
  %205 = vmatmul.mubr.f32.gmra.mrb[0].mxu0 %v73
  %v206 = vpop.f32.mrb[0].mxu0
  %v207 = vadd.f32 %v39, %v206
  %v208 = vpop.f32.mrb[0].mxu0
  %209 = vmatprep.mubr.f32.mxu0 0.0
  %210 = vmatmul.mubr.f32.gmra.mrb[0].mxu0 %v76
  %v211 = vpop.f32.mrb[0].mxu0
  %v212 = vadd.f32 %v39, %v211
  %v213 = vpop.f32.mrb[0].mxu0
  %214 = vmatprep.mubr.f32.mxu0 0.0
  %215 = vmatmul.mubr.f32.gmra.mrb[0].mxu0 %v79
  %v216 = vpop.f32.mrb[0].mxu0
  %v217 = vadd.f32 %v39, %v216
  %v218 = vpop.f32.mrb[0].mxu0
  %219 = vmatprep.mubr.f32.mxu0 0.0
  %220 = vmatmul.mubr.f32.gmra.mrb[0].mxu0 %v82
  %v221 = vpop.f32.mrb[0].mxu0
  %v222 = vadd.f32 %v39, %v221
  %v223 = vpop.f32.mrb[0].mxu0
  %224 = vmatprep.mubr.f32.mxu0 0.0
  %225 = vmatmul.mubr.f32.gmra.mrb[0].mxu0 %v85
  %v226 = vpop.f32.mrb[0].mxu0
  %v227 = vadd.f32 %v39, %v226
  %v228 = vpop.f32.mrb[0].mxu0
  %229 = vmatprep.mubr.f32.mxu0 0.0
  %230 = vmatmul.mubr.f32.gmra.mrb[0].mxu0 %v88
  %v231 = vpop.f32.mrb[0].mxu0
  %v232 = vadd.f32 %v39, %v231
  %v233 = vpop.f32.mrb[0].mxu0
  %234 = vdwg.mxu0
  %v235 = vld [vmem:[%s3] sm:$0xff]
  %v236 = vld [vmem:[%s3 + $0x8] sm:$0xff]
  %v237 = vld [vmem:[%s3 + $0x10] sm:$0xff]
  %v238 = vld [vmem:[%s3 + $0x18] sm:$0xff]
  %v239 = vld [vmem:[%s3 + $0x20] sm:$0xff]
  %v240 = vld [vmem:[%s3 + $0x28] sm:$0xff]
  %v241 = vld [vmem:[%s3 + $0x30] sm:$0xff]
  %v242 = vld [vmem:[%s3 + $0x38] sm:$0xff]
  %v243 = vld [vmem:[%s3 + $0x40] sm:$0xff]
  %v244 = vld [vmem:[%s3 + $0x48] sm:$0xff]
  %v245 = vld [vmem:[%s3 + $0x50] sm:$0xff]
  %v246 = vld [vmem:[%s3 + $0x58] sm:$0xff]
  %v247 = vld [vmem:[%s3 + $0x60] sm:$0xff]
  %v248 = vld [vmem:[%s3 + $0x68] sm:$0xff]
  %v249 = vld [vmem:[%s3 + $0x70] sm:$0xff]
  %v250 = vld [vmem:[%s3 + $0x78] sm:$0xff]
  %252 = vset.pattern.permute.xlu0 0
  %253 = vperm.xlu0 %252, %v235
  %v254 = vpop.permute.xlu0 %253
  %257 = vset.pattern.permute.xlu0 0
  %258 = vperm.xlu0 %257, %v236
  %v259 = vpop.permute.xlu0 %258
  %262 = vset.pattern.permute.xlu0 0
  %263 = vperm.xlu0 %262, %v237
  %v264 = vpop.permute.xlu0 %263
  %267 = vset.pattern.permute.xlu0 0
  %268 = vperm.xlu0 %267, %v238
  %v269 = vpop.permute.xlu0 %268
  %272 = vset.pattern.permute.xlu0 0
  %273 = vperm.xlu0 %272, %v239
  %v274 = vpop.permute.xlu0 %273
  %277 = vset.pattern.permute.xlu0 0
  %278 = vperm.xlu0 %277, %v240
  %v279 = vpop.permute.xlu0 %278
  %282 = vset.pattern.permute.xlu0 0
  %283 = vperm.xlu0 %282, %v241
  %v284 = vpop.permute.xlu0 %283
  %287 = vset.pattern.permute.xlu0 0
  %288 = vperm.xlu0 %287, %v242
  %v289 = vpop.permute.xlu0 %288
  %292 = vset.pattern.permute.xlu0 0
  %293 = vperm.xlu0 %292, %v243
  %v294 = vpop.permute.xlu0 %293
  %297 = vset.pattern.permute.xlu0 0
  %298 = vperm.xlu0 %297, %v244
  %v299 = vpop.permute.xlu0 %298
  %302 = vset.pattern.permute.xlu0 0
  %303 = vperm.xlu0 %302, %v245
  %v304 = vpop.permute.xlu0 %303
  %307 = vset.pattern.permute.xlu0 0
  %308 = vperm.xlu0 %307, %v246
  %v309 = vpop.permute.xlu0 %308
  %312 = vset.pattern.permute.xlu0 0
  %313 = vperm.xlu0 %312, %v247
  %v314 = vpop.permute.xlu0 %313
  %317 = vset.pattern.permute.xlu0 0
  %318 = vperm.xlu0 %317, %v248
  %v319 = vpop.permute.xlu0 %318
  %322 = vset.pattern.permute.xlu0 0
  %323 = vperm.xlu0 %322, %v249
  %v324 = vpop.permute.xlu0 %323
  %327 = vset.pattern.permute.xlu0 0
  %328 = vperm.xlu0 %327, %v250
  %v329 = vpop.permute.xlu0 %328
  %v331 = vmul.f32 %v157, %v254
  %v332 = vmul.f32 %v162, %v259
  %v333 = vmul.f32 %v167, %v264
  %v334 = vmul.f32 %v172, %v269
  %v335 = vmul.f32 %v177, %v274
  %v336 = vmul.f32 %v182, %v279
  %v337 = vmul.f32 %v187, %v284
  %v338 = vmul.f32 %v192, %v289
  %v339 = vmul.f32 %v197, %v294
  %v340 = vmul.f32 %v202, %v299
  %v341 = vmul.f32 %v207, %v304
  %v342 = vmul.f32 %v212, %v309
  %v343 = vmul.f32 %v217, %v314
  %v344 = vmul.f32 %v222, %v319
  %v345 = vmul.f32 %v227, %v324
  %v346 = vmul.f32 %v232, %v329
  %v347 = vpack.c.bf16 %v332, %v331
  %v348 = vpack.c.bf16 %v334, %v333
  %v349 = vpack.c.bf16 %v336, %v335
  %v350 = vpack.c.bf16 %v338, %v337
  %v351 = vpack.c.bf16 %v340, %v339
  %v352 = vpack.c.bf16 %v342, %v341
  %v353 = vpack.c.bf16 %v344, %v343
  %v354 = vpack.c.bf16 %v346, %v345
  %v363 = vunpack.c.l.b16 %v347
  %v364 = vunpack.c.h.b16 %v347
  %v365 = vunpack.c.l.b16 %v348
  %v366 = vunpack.c.h.b16 %v348
  %v367 = vunpack.c.l.b16 %v349
  %v368 = vunpack.c.h.b16 %v349
  %v369 = vunpack.c.l.b16 %v350
  %v370 = vunpack.c.h.b16 %v350
  %v371 = vunpack.c.l.b16 %v351
  %v372 = vunpack.c.h.b16 %v351
  %v373 = vunpack.c.l.b16 %v352
  %v374 = vunpack.c.h.b16 %v352
  %v375 = vunpack.c.l.b16 %v353
  %v376 = vunpack.c.h.b16 %v353
  %v377 = vunpack.c.l.b16 %v354
  %v378 = vunpack.c.h.b16 %v354
  %v379 = vpack.c.b16 %v363, %v363
  %v380 = vpack.c.b16 %v364, %v364
  %v381 = vpack.c.b16 %v365, %v365
  %v382 = vpack.c.b16 %v366, %v366
  %v383 = vpack.c.b16 %v367, %v367
  %v384 = vpack.c.b16 %v368, %v368
  %v385 = vpack.c.b16 %v369, %v369
  %v386 = vpack.c.b16 %v370, %v370
  %v387 = vpack.c.b16 %v371, %v371
  %v388 = vpack.c.b16 %v372, %v372
  %v389 = vpack.c.b16 %v373, %v373
  %v390 = vpack.c.b16 %v374, %v374
  %v391 = vpack.c.b16 %v375, %v375
  %v392 = vpack.c.b16 %v376, %v376
  %v393 = vpack.c.b16 %v377, %v377
  %v394 = vpack.c.b16 %v378, %v378
  %vm411 = vcmask 158720
  %412 = vst.msk [vmem:[%s4] sm:$0xf] %vm411, %v379
  %413 = vst.msk [vmem:[%s4 + $0x4] sm:$0xf] %vm411, %v380
  %414 = vst.msk [vmem:[%s4 + $0x8] sm:$0xf] %vm411, %v381
  %415 = vst.msk [vmem:[%s4 + $0xc] sm:$0xf] %vm411, %v382
  %416 = vst.msk [vmem:[%s4 + $0x10] sm:$0xf] %vm411, %v383
  %417 = vst.msk [vmem:[%s4 + $0x14] sm:$0xf] %vm411, %v384
  %418 = vst.msk [vmem:[%s4 + $0x18] sm:$0xf] %vm411, %v385
  %419 = vst.msk [vmem:[%s4 + $0x1c] sm:$0xf] %vm411, %v386
  %420 = vst.msk [vmem:[%s4 + $0x20] sm:$0xf] %vm411, %v387
  %421 = vst.msk [vmem:[%s4 + $0x24] sm:$0xf] %vm411, %v388
  %422 = vst.msk [vmem:[%s4 + $0x28] sm:$0xf] %vm411, %v389
  %423 = vst.msk [vmem:[%s4 + $0x2c] sm:$0xf] %vm411, %v390
  %424 = vst.msk [vmem:[%s4 + $0x30] sm:$0xf] %vm411, %v391
  %425 = vst.msk [vmem:[%s4 + $0x34] sm:$0xf] %vm411, %v392
  %426 = vst.msk [vmem:[%s4 + $0x38] sm:$0xf] %vm411, %v393
  %427 = vst.msk [vmem:[%s4 + $0x3c] sm:$0xf] %vm411, %v394
  // Predicated region
  $region18: #{tpu_custom_call.1} parent=0 // pred_check
    _
  $region19: #{tpu_custom_call.1} parent=0 // pred_check_branch
    %429 = sbr.rel (0) target = $region21
  $region20: #{tpu_custom_call.1} parent=0 // pred_region
    _
  $region21: #{tpu_custom_call.1} parent=0 // pred_fallthru
    _
  // Predicated region
  $region22: #{tpu_custom_call.1} parent=0 // pred_check
    _
  $region23: #{tpu_custom_call.1} parent=0 // pred_check_branch
    %431 = sbr.rel (0) target = $region25
  $region24: #{tpu_custom_call.1} parent=0 // pred_region
    _
  $region25: #{tpu_custom_call.1} parent=0 // pred_fallthru
    _

</llo_original>
